<compile_context>
chip_gen: v7x
topology: tpu7x:2x2x1
jax: 0.10.0
libtpu: 0.0.40
codegen_flags: <defaults>
</compile_context>

<pallas_src>
import functools

import jax
import jax.numpy as jnp
from jax.experimental import pallas as pl
from jax.experimental.pallas import tpu as pltpu


def _round_up(x, m):
    return ((x + m - 1) // m) * m


def _mlp_fused_kernel(x_ref, *refs, n_layers):
    """Entire MLP in one kernel body.

    x_ref : (TB, d_in)            f32 input tile (unpadded)
    refs  : n_layers weight refs  (K_pad_l, N_pad_l) bf16, pre-transposed (in, out)
            n_layers bias refs    (1, N_pad_l)       f32
            o_ref                 (TB, d_out)        f32 output tile
    """
    w_refs = refs[:n_layers]
    b_refs = refs[n_layers:2 * n_layers]
    o_ref = refs[2 * n_layers]

    h = x_ref[...].astype(jnp.float32)
    for layer in range(n_layers):
        w = w_refs[layer][...]                    # (K_pad, N_pad) bf16
        k = w.shape[0]
        hk = h if h.shape[1] == k else h[:, :k]   # drop all-zero padded lanes
        # bf16 x bf16 MXU matmul, f32 accumulation.
        h = jnp.dot(hk.astype(w.dtype), w, preferred_element_type=jnp.float32)
        h = h + b_refs[layer][...]                # f32 epilogue
        if layer < n_layers - 1:
            h = jnp.maximum(h, 0.0)

    d_out = o_ref.shape[-1]
    if h.shape[1] != d_out:
        h = h[:, :d_out]
    o_ref[...] = h.astype(o_ref.dtype)


def init_mlp_params(key, dim, hidden_size, wscale=1.0, dtype=jnp.float32):
    """nn.Linear-style init U(-1/sqrt(in), 1/sqrt(in)), scaled by wscale
    (matches MLP.__init__). Weights stored PyTorch-style (out, in), f32."""
    units = [dim] + list(hidden_size) + [dim]
    params = []
    for inp, outp in zip(units[:-1], units[1:]):
        key, kw, kb = jax.random.split(key, 3)
        bound = 1.0 / (inp ** 0.5)
        w = jax.random.uniform(kw, (outp, inp), dtype, -bound, bound) * wscale
        b = jax.random.uniform(kb, (outp,), dtype, -bound, bound) * wscale
        params.append((w, b))
    return params


def pack_mlp_params(params, lane=128, k_align=16, w_dtype=jnp.bfloat16):
    """ONE-TIME packing (at parameter creation, never per forward):
      * transpose each weight to (in, out),
      * cast weights to bf16,
      * pad the contraction dim only to a bf16-sublane multiple (16) — except
        layer 0, which matches the raw input width exactly — and the output
        dim to a lane-dense multiple of 128,
      * keep biases in f32 (epilogue runs in f32)."""
    units = [params[0][0].shape[1]] + [w.shape[0] for (w, _) in params]
    w_list, b_list = [], []
    prev_width = units[0]                      # activation width entering layer 0
    for layer, (w, b) in enumerate(params):
        outp, inp = w.shape
        if layer == 0:
            k_pad = inp                        # x is passed unpadded
        else:
            k_pad = min(_round_up(inp, k_align), prev_width)
        n_pad = _round_up(outp, lane)
        wt = jnp.zeros((k_pad, n_pad), w_dtype).at[:inp, :outp].set(
            w.T.astype(w_dtype))
        bp = jnp.zeros((1, n_pad), jnp.float32).at[0, :outp].set(
            b.astype(jnp.float32))
        w_list.append(wt)
        b_list.append(bp)
        prev_width = n_pad
    return {
        "w": w_list,                           # L x (K_pad_l, N_pad_l) bf16
        "b": b_list,                           # L x (1, N_pad_l)       f32
        "units": units,
        "dim_in": units[0],
        "dim_out": units[-1],
        "n_layers": len(params),
    }


def mlp_forward(packed, x):
    """Reproduces MLP.forward with a single fused Pallas call."""
    B, d_in = x.shape
    assert d_in == packed["dim_in"]
    d_out = packed["dim_out"]
    L = packed["n_layers"]
    ws, bs = packed["w"], packed["b"]
    units = packed["units"]

    # Batch grid axis ("parallel" -> shards across v7x's 2 TensorCores when B
    # is large). Full-array blocks in the feature dims: no wrapper pad/slice.
    tb = B if B <= 256 else 256
    grid = (pl.cdiv(B, tb),)

    in_specs = [pl.BlockSpec((tb, d_in), lambda i: (i, 0))]
    for w in ws:
        in_specs.append(pl.BlockSpec(w.shape, lambda i: (0, 0)))
    for b in bs:
        in_specs.append(pl.BlockSpec(b.shape, lambda i: (0, 0)))
    out_specs = pl.BlockSpec((tb, d_out), lambda i: (i, 0))

    flops = 2 * B * sum(i * o for i, o in zip(units[:-1], units[1:]))
    bytes_accessed = (
        x.size * x.dtype.itemsize
        + sum(w.size * w.dtype.itemsize for w in ws)
        + sum(b.size * b.dtype.itemsize for b in bs)
        + B * d_out * x.dtype.itemsize
    )

    out = pl.pallas_call(
        functools.partial(_mlp_fused_kernel, n_layers=L),
        out_shape=jax.ShapeDtypeStruct((B, d_out), x.dtype),
        grid=grid,
        in_specs=in_specs,
        out_specs=out_specs,
        compiler_params=pltpu.CompilerParams(
            dimension_semantics=("parallel",),
        ),
        cost_estimate=pl.CostEstimate(
            flops=flops, transcendentals=0, bytes_accessed=bytes_accessed),
    )(x, *ws, *bs)

    return out


def mlp_reference(params, x):
    n = len(params)
    for i, (w, b) in enumerate(params):
        x = x @ w.T + b
        if i < n - 1:
            x = jnp.maximum(x, 0.0)
    return x


if __name__ == "__main__":
    key = jax.random.PRNGKey(0)
    kp, kx = jax.random.split(key)

    dim = 32
    hidden_size = [64, 64]
    batch = 8
    wscale = 1.0

    params = init_mlp_params(kp, dim, hidden_size, wscale=wscale)
    packed = pack_mlp_params(params)          # transpose + bf16 + pad, once
    x = jax.random.normal(kx, (batch, dim), jnp.float32)

    y = mlp_forward(packed, x)
    y = jax.block_until_ready(y)

    y_ref = mlp_reference(params, x)          # f32 reference
    assert y.shape == (batch, dim)
    # bf16 weights/activations on the MXU path -> loosened tolerance.
    assert jnp.allclose(y, y_ref, atol=5e-2, rtol=5e-2), (
        float(jnp.max(jnp.abs(y - y_ref))))

    print("KERNEL_OK")
</pallas_src>

<mosaic_0001>
module attributes {stable_mosaic.version = 11 : i64} {
  func.func @_mlp_fused_kernel(%arg0: i32, %arg1: memref<8x32xf32, #tpu.memory_space<vmem>>, %arg2: memref<32x128xbf16, #tpu.memory_space<vmem>>, %arg3: memref<64x128xbf16, #tpu.memory_space<vmem>>, %arg4: memref<64x128xbf16, #tpu.memory_space<vmem>>, %arg5: memref<1x128xf32, #tpu.memory_space<vmem>>, %arg6: memref<1x128xf32, #tpu.memory_space<vmem>>, %arg7: memref<1x128xf32, #tpu.memory_space<vmem>>, %arg8: memref<8x32xf32, #tpu.memory_space<vmem>>) attributes {dimension_semantics = [#tpu.dimension_semantics<parallel>], iteration_bounds = array<i64: 1>, scalar_prefetch = 0 : i64, scratch_operands = 0 : i64, tpu.core_type = #tpu.core_type<tc>, window_params = [{transform_indices = @transform_0, window_bounds = array<i64: 8, 32>}, {pipeline_mode = #tpu.pipeline_mode<synchronous>, transform_indices = @transform_1, window_bounds = array<i64: 32, 128>}, {pipeline_mode = #tpu.pipeline_mode<synchronous>, transform_indices = @transform_2, window_bounds = array<i64: 64, 128>}, {pipeline_mode = #tpu.pipeline_mode<synchronous>, transform_indices = @transform_3, window_bounds = array<i64: 64, 128>}, {pipeline_mode = #tpu.pipeline_mode<synchronous>, transform_indices = @transform_4, window_bounds = array<i64: 1, 128>}, {pipeline_mode = #tpu.pipeline_mode<synchronous>, transform_indices = @transform_5, window_bounds = array<i64: 1, 128>}, {pipeline_mode = #tpu.pipeline_mode<synchronous>, transform_indices = @transform_6, window_bounds = array<i64: 1, 128>}, {transform_indices = @transform_7, window_bounds = array<i64: 8, 32>}]} {
    %c0 = arith.constant 0 : index
    %c0_0 = arith.constant 0 : index
    %0 = vector.load %arg1[%c0, %c0_0] : memref<8x32xf32, #tpu.memory_space<vmem>>, vector<8x32xf32>
    %c0_1 = arith.constant 0 : index
    %c0_2 = arith.constant 0 : index
    %1 = vector.load %arg2[%c0_1, %c0_2] : memref<32x128xbf16, #tpu.memory_space<vmem>>, vector<32x128xbf16>
    %2 = arith.truncf %0 : vector<8x32xf32> to vector<8x32xbf16>
    %cst = arith.constant dense<0.000000e+00> : vector<8x128xf32>
    %3 = tpu.matmul %2, %1, %cst {dimension_numbers = #tpu.dot_dimension_numbers<[1], [0], [0], [1], [0, 0, 1, 1], [], []>} : vector<8x32xbf16>, vector<32x128xbf16>, vector<8x128xf32> -> vector<8x128xf32>
    %c0_3 = arith.constant 0 : index
    %c0_4 = arith.constant 0 : index
    %4 = vector.load %arg5[%c0_3, %c0_4] : memref<1x128xf32, #tpu.memory_space<vmem>>, vector<1x128xf32>
    %5 = vector.broadcast %4 : vector<1x128xf32> to vector<8x128xf32>
    %6 = arith.addf %3, %5 : vector<8x128xf32>
    %cst_5 = arith.constant 0.000000e+00 : f32
    %7 = vector.broadcast %cst_5 : f32 to vector<8x128xf32>
    %8 = arith.maximumf %6, %7 : vector<8x128xf32>
    %c0_6 = arith.constant 0 : index
    %c0_7 = arith.constant 0 : index
    %9 = vector.load %arg3[%c0_6, %c0_7] : memref<64x128xbf16, #tpu.memory_space<vmem>>, vector<64x128xbf16>
    %10 = vector.extract_strided_slice %8 {offsets = [0, 0], sizes = [8, 64], strides = [1, 1]} : vector<8x128xf32> to vector<8x64xf32>
    %11 = arith.truncf %10 : vector<8x64xf32> to vector<8x64xbf16>
    %cst_8 = arith.constant dense<0.000000e+00> : vector<8x128xf32>
    %12 = tpu.matmul %11, %9, %cst_8 {dimension_numbers = #tpu.dot_dimension_numbers<[1], [0], [0], [1], [0, 0, 1, 1], [], []>} : vector<8x64xbf16>, vector<64x128xbf16>, vector<8x128xf32> -> vector<8x128xf32>
    %c0_9 = arith.constant 0 : index
    %c0_10 = arith.constant 0 : index
    %13 = vector.load %arg6[%c0_9, %c0_10] : memref<1x128xf32, #tpu.memory_space<vmem>>, vector<1x128xf32>
    %14 = vector.broadcast %13 : vector<1x128xf32> to vector<8x128xf32>
    %15 = arith.addf %12, %14 : vector<8x128xf32>
    %cst_11 = arith.constant 0.000000e+00 : f32
    %16 = vector.broadcast %cst_11 : f32 to vector<8x128xf32>
    %17 = arith.maximumf %15, %16 : vector<8x128xf32>
    %c0_12 = arith.constant 0 : index
    %c0_13 = arith.constant 0 : index
    %18 = vector.load %arg4[%c0_12, %c0_13] : memref<64x128xbf16, #tpu.memory_space<vmem>>, vector<64x128xbf16>
    %19 = vector.extract_strided_slice %17 {offsets = [0, 0], sizes = [8, 64], strides = [1, 1]} : vector<8x128xf32> to vector<8x64xf32>
    %20 = arith.truncf %19 : vector<8x64xf32> to vector<8x64xbf16>
    %cst_14 = arith.constant dense<0.000000e+00> : vector<8x128xf32>
    %21 = tpu.matmul %20, %18, %cst_14 {dimension_numbers = #tpu.dot_dimension_numbers<[1], [0], [0], [1], [0, 0, 1, 1], [], []>} : vector<8x64xbf16>, vector<64x128xbf16>, vector<8x128xf32> -> vector<8x128xf32>
    %c0_15 = arith.constant 0 : index
    %c0_16 = arith.constant 0 : index
    %22 = vector.load %arg7[%c0_15, %c0_16] : memref<1x128xf32, #tpu.memory_space<vmem>>, vector<1x128xf32>
    %23 = vector.broadcast %22 : vector<1x128xf32> to vector<8x128xf32>
    %24 = arith.addf %21, %23 : vector<8x128xf32>
    %25 = vector.extract_strided_slice %24 {offsets = [0, 0], sizes = [8, 32], strides = [1, 1]} : vector<8x128xf32> to vector<8x32xf32>
    %c0_17 = arith.constant 0 : index
    %c0_18 = arith.constant 0 : index
    %26 = vector.load %arg8[%c0_17, %c0_18] : memref<8x32xf32, #tpu.memory_space<vmem>>, vector<8x32xf32>
    tpu.vector_store %arg8[%c0_17, %c0_18], %25 {strides = array<i32>} : memref<8x32xf32, #tpu.memory_space<vmem>>, vector<8x32xf32>,
    return
  }
  func.func @transform_0(%arg0: i32) -> (i32, i32) {
    %c0_i32 = arith.constant 0 : i32
    %c0_i32_0 = arith.constant 0 : i32
    return %arg0, %c0_i32 : i32, i32
  }
  func.func @transform_1(%arg0: i32) -> (i32, i32) {
    %c0_i32 = arith.constant 0 : i32
    %c0_i32_0 = arith.constant 0 : i32
    %c0_i32_1 = arith.constant 0 : i32
    return %c0_i32, %c0_i32_0 : i32, i32
  }
  func.func @transform_2(%arg0: i32) -> (i32, i32) {
    %c0_i32 = arith.constant 0 : i32
    %c0_i32_0 = arith.constant 0 : i32
    %c0_i32_1 = arith.constant 0 : i32
    return %c0_i32, %c0_i32_0 : i32, i32
  }
  func.func @transform_3(%arg0: i32) -> (i32, i32) {
    %c0_i32 = arith.constant 0 : i32
    %c0_i32_0 = arith.constant 0 : i32
    %c0_i32_1 = arith.constant 0 : i32
    return %c0_i32, %c0_i32_0 : i32, i32
  }
  func.func @transform_4(%arg0: i32) -> (i32, i32) {
    %c0_i32 = arith.constant 0 : i32
    %c0_i32_0 = arith.constant 0 : i32
    %c0_i32_1 = arith.constant 0 : i32
    return %c0_i32, %c0_i32_0 : i32, i32
  }
  func.func @transform_5(%arg0: i32) -> (i32, i32) {
    %c0_i32 = arith.constant 0 : i32
    %c0_i32_0 = arith.constant 0 : i32
    %c0_i32_1 = arith.constant 0 : i32
    return %c0_i32, %c0_i32_0 : i32, i32
  }
  func.func @transform_6(%arg0: i32) -> (i32, i32) {
    %c0_i32 = arith.constant 0 : i32
    %c0_i32_0 = arith.constant 0 : i32
    %c0_i32_1 = arith.constant 0 : i32
    return %c0_i32, %c0_i32_0 : i32, i32
  }
  func.func @transform_7(%arg0: i32) -> (i32, i32) {
    %c0_i32 = arith.constant 0 : i32
    %c0_i32_0 = arith.constant 0 : i32
    return %arg0, %c0_i32 : i32, i32
  }
}

</mosaic_0001>

<llo_original>
// kernel: tpu_custom_call.1
$region0: #{tpu_custom_call.1}
  #allocation0 [shape = 'u32[]', space=smem, size = 0x4, offset = 0x4, fixed_abs, tag = 'smem constant byte address 0x4 - core index']
  #allocation1 [shape = 'u32[144,128]{1,0:T(1,128)}', space=vmem, size = 0x12000, scoped, tag = 'internal scratch']
  %s0 = inlined_call_operand.hbm [shape: f32[8,32], index: 0, kind: input, shape index: {}]
  %s1 = inlined_call_operand.hbm [shape: bf16[32,128], index: 1, kind: input, shape index: {}]
  %s2 = inlined_call_operand.hbm [shape: bf16[64,128], index: 2, kind: input, shape index: {}]
  %s3 = inlined_call_operand.hbm [shape: bf16[64,128], index: 3, kind: input, shape index: {}]
  %s4 = inlined_call_operand.vmem [shape: f32[1,128], index: 4, kind: input, shape index: {}]
  %s5 = inlined_call_operand.vmem [shape: f32[1,128], index: 5, kind: input, shape index: {}]
  %s6 = inlined_call_operand.vmem [shape: f32[1,128], index: 6, kind: input, shape index: {}]
  %s7 = inlined_call_operand.hbm [shape: f32[8,32], index: 7, kind: output, shape index: {}]
  %s8 = sld [smem:[#allocation0]]
  $region54: #{tpu_custom_call.1} parent=0
    _
  %s10 = ssub.s32 1, %s8
  %s11 = scalar_select 0, %s10, %s8
  $region1: #{tpu_custom_call.1} parent=0
    #allocation2 [shape = 'u8[4096]{0}', space=vmem, size = 0x1000, scoped, tag = 'input window, operand 0, single buffered']
    #allocation3 [shape = 's32[1]{0}', space=sflag, size = 0x4, scoped, tag = 'scoped memory for tpu_custom_call.1']
    #allocation4 [shape = 's32[1]{0}', space=sflag, size = 0x4, scoped, tag = 'scoped memory for tpu_custom_call.1']
    #allocation5 [shape = 'u8[8192]{0}', space=vmem, size = 0x2000, scoped, tag = 'input window, operand 1, single buffered']
    #allocation6 [shape = 's32[1]{0}', space=sflag, size = 0x4, scoped, tag = 'scoped memory for tpu_custom_call.1']
    #allocation7 [shape = 'u8[16384]{0}', space=vmem, size = 0x4000, scoped, tag = 'input window, operand 2, single buffered']
    #allocation8 [shape = 'u8[16384]{0}', space=vmem, size = 0x4000, scoped, tag = 'input window, operand 3, single buffered']
    #allocation9 [shape = 's32[1]{0}', space=sflag, size = 0x4, scoped, tag = 'scoped memory for tpu_custom_call.1']
    #allocation10 [shape = 'u8[4096]{0}', space=vmem, size = 0x1000, scoped, tag = 'output window, operand 0, single buffered']
    %12 = vsyncpa [#allocation3], 0
    %13 = vsyncpa [#allocation6], 0
    %14 = vsyncpa [#allocation9], 0
    %15 = vsyncpa [#allocation4], 0
    // Predicated region
    $region2: #{tpu_custom_call.1} parent=1 // pred_check
      _
    $region3: #{tpu_custom_call.1} parent=1 // pred_check_branch
      %17 = sbr.rel (0) target = $region5
    $region4: #{tpu_custom_call.1} parent=1 // pred_region
      %s19 = ssub.s32 128, 128
      %20 = vsyncadd [#allocation3], %s19
      %s22 = sshll.u32 [#allocation2], 4
      %s23 = int_to_ptr.vmem [resolvable:$true] %s22
      %25 = dma.hbm_to_vmem [thread:$0]  %s0, 128, %s23, [#allocation3]
    $region5: #{tpu_custom_call.1} parent=1 // pred_fallthru
      _
    // Predicated region
    $region6: #{tpu_custom_call.1} parent=1 // pred_check
      _
    $region7: #{tpu_custom_call.1} parent=1 // pred_check_branch
      %27 = sbr.rel (0) target = $region9
    $region8: #{tpu_custom_call.1} parent=1 // pred_region
      %s29 = ssub.s32 256, 256
      %30 = vsyncadd [#allocation6], %s29
      %s31 = sshll.u32 [#allocation5], 4
      %s32 = int_to_ptr.vmem [resolvable:$true] %s31
      %37 = dma.hbm_to_vmem [thread:$0]  %s1, 256, %s32, [#allocation6], 64, 64, 4
    $region9: #{tpu_custom_call.1} parent=1 // pred_fallthru
      _
    // Predicated region
    $region10: #{tpu_custom_call.1} parent=1 // pred_check
      _
    $region11: #{tpu_custom_call.1} parent=1 // pred_check_branch
      %39 = sbr.rel (0) target = $region13
    $region12: #{tpu_custom_call.1} parent=1 // pred_region
      %s41 = ssub.s32 512, 512
      %42 = vsyncadd [#allocation6], %s41
      %s43 = sshll.u32 [#allocation7], 4
      %s44 = int_to_ptr.vmem [resolvable:$true] %s43
      %49 = dma.hbm_to_vmem [thread:$0]  %s2, 512, %s44, [#allocation6], 64, 64, 4
    $region13: #{tpu_custom_call.1} parent=1 // pred_fallthru
      _
    // Predicated region
    $region14: #{tpu_custom_call.1} parent=1 // pred_check
      _
    $region15: #{tpu_custom_call.1} parent=1 // pred_check_branch
      %51 = sbr.rel (0) target = $region17
    $region16: #{tpu_custom_call.1} parent=1 // pred_region
      %s53 = ssub.s32 512, 512
      %54 = vsyncadd [#allocation9], %s53
      %s55 = sshll.u32 [#allocation8], 4
      %s56 = int_to_ptr.vmem [resolvable:$true] %s55
      %61 = dma.hbm_to_vmem [thread:$0]  %s3, 512, %s56, [#allocation9], 64, 64, 4
    $region17: #{tpu_custom_call.1} parent=1 // pred_fallthru
      _
    // Predicated region
    $region18: #{tpu_custom_call.1} parent=1 // pred_check
      _
    $region19: #{tpu_custom_call.1} parent=1 // pred_check_branch
      %63 = sbr.rel (0) target = $region21
    $region20: #{tpu_custom_call.1} parent=1 // pred_region
      _
    $region21: #{tpu_custom_call.1} parent=1 // pred_fallthru
      _
    // Predicated region
    $region22: #{tpu_custom_call.1} parent=1 // pred_check
      _
    $region23: #{tpu_custom_call.1} parent=1 // pred_check_branch
      %65 = sbr.rel (0) target = $region25
    $region24: #{tpu_custom_call.1} parent=1 // pred_region
      _
    $region25: #{tpu_custom_call.1} parent=1 // pred_fallthru
      _
    // Predicated region
    $region26: #{tpu_custom_call.1} parent=1 // pred_check
      _
    $region27: #{tpu_custom_call.1} parent=1 // pred_check_branch
      %67 = sbr.rel (0) target = $region29
    $region28: #{tpu_custom_call.1} parent=1 // pred_region
      _
    $region29: #{tpu_custom_call.1} parent=1 // pred_fallthru
      _
    // Predicated region
    $region30: #{tpu_custom_call.1} parent=1 // pred_check
      _
    $region31: #{tpu_custom_call.1} parent=1 // pred_check_branch
      %69 = sbr.rel (0) target = $region33
    $region32: #{tpu_custom_call.1} parent=1 // pred_region
      %70 = dma.done [#allocation3], 128
    $region33: #{tpu_custom_call.1} parent=1 // pred_fallthru
      _
    // Predicated region
    $region34: #{tpu_custom_call.1} parent=1 // pred_check
      _
    $region35: #{tpu_custom_call.1} parent=1 // pred_check_branch
      %72 = sbr.rel (0) target = $region37
    $region36: #{tpu_custom_call.1} parent=1 // pred_region
      %73 = dma.done [#allocation6], 256
    $region37: #{tpu_custom_call.1} parent=1 // pred_fallthru
      _
    // Predicated region
    $region38: #{tpu_custom_call.1} parent=1 // pred_check
      _
    $region39: #{tpu_custom_call.1} parent=1 // pred_check_branch
      %75 = sbr.rel (0) target = $region41
    $region40: #{tpu_custom_call.1} parent=1 // pred_region
      %76 = dma.done [#allocation6], 512
    $region41: #{tpu_custom_call.1} parent=1 // pred_fallthru
      _
    // Predicated region
    $region42: #{tpu_custom_call.1} parent=1 // pred_check
      _
    $region43: #{tpu_custom_call.1} parent=1 // pred_check_branch
      %78 = sbr.rel (0) target = $region45
    $region44: #{tpu_custom_call.1} parent=1 // pred_region
      %79 = dma.done [#allocation9], 512
    $region45: #{tpu_custom_call.1} parent=1 // pred_fallthru
      _
    %v81 = vld [vmem:[#allocation2] sm:$0xff]
    %v82 = vld [vmem:[#allocation5] sm:$0xf]
    %v83 = vld [vmem:[#allocation5 + $0x4] sm:$0xf]
    %v84 = vld [vmem:[#allocation5 + $0x8] sm:$0xf]
    %v85 = vld [vmem:[#allocation5 + $0xc] sm:$0xf]
    %v86 = vpack.c.bf16 %v81, %v81
    %v87 = vld [vmem:[%s4] sm:$0x1]
    %v89 = vlaneseq
    %v90 = vshrl.u32 %v89, 7
    %v91 = vsub.s32 0, %v90
    %v92 = vrot.slane %v87, %v91
    %v98 = vunpack.c.l.b16 %v82
    %v99 = vunpack.c.l.b16 %v83
    %v100 = vunpack.c.l.b16 %v84
    %v101 = vunpack.c.l.b16 %v85
    %v102 = vpack.c.b16 %v99, %v98
    %v103 = vpack.c.b16 %v101, %v100
    %vm106 = vcmask 261120
    %v108 = vsel %vm106, %v86, 0
    %110 = vmatprep.subr.bf16.mxu0 0
    %111 = vmatpush1.bf16.msra.mxu0 %v102
    %112 = vmatprep.subr.bf16.mxu0 0
    %113 = vmatpush1.bf16.msra.mxu0 %v103
    %114 = vmatprep.subr.bf16.mxu0 0
    %115 = vmatpush1.bf16.msra.mxu0 0
    %116 = vmatprep.subr.bf16.mxu0 0
    %117 = vmatpush1.bf16.msra.mxu0 0
    %118 = vmatprep.subr.bf16.mxu0 0
    %119 = vmatpush1.bf16.msra.mxu0 0
    %120 = vmatprep.subr.bf16.mxu0 0
    %121 = vmatpush1.bf16.msra.mxu0 0
    %122 = vmatprep.subr.bf16.mxu0 0
    %123 = vmatpush1.bf16.msra.mxu0 0
    %124 = vmatprep.subr.bf16.mxu0 0
    %125 = vmatpush1.bf16.msra.mxu0 0
    %126 = vmatprep.subr.bf16.mxu0 0
    %127 = vmatpush1.bf16.msra.mxu0 0
    %128 = vmatprep.subr.bf16.mxu0 0
    %129 = vmatpush1.bf16.msra.mxu0 0
    %130 = vmatprep.subr.bf16.mxu0 0
    %131 = vmatpush1.bf16.msra.mxu0 0
    %132 = vmatprep.subr.bf16.mxu0 0
    %133 = vmatpush1.bf16.msra.mxu0 0
    %134 = vmatprep.subr.bf16.mxu0 0
    %135 = vmatpush1.bf16.msra.mxu0 0
    %136 = vmatprep.subr.bf16.mxu0 0
    %137 = vmatpush1.bf16.msra.mxu0 0
    %138 = vmatprep.subr.bf16.mxu0 0
    %139 = vmatpush1.bf16.msra.mxu0 0
    %140 = vmatprep.subr.bf16.mxu0 0
    %141 = vmatpush1.bf16.msra.mxu0 0
    %142 = vmatprep.mubr.bf16.mxu0 0
    %143 = vmatmul.mubr.bf16.gmra.mrb[0].mxu0 %v108
    %v144 = vpop.f32.mrb[0].mxu0
    %v145 = vadd.f32 %v92, %v144
    %v146 = vpop.f32.mrb[0].mxu0
    %v147 = vpop.f32.mrb[0].mxu0
    %v148 = vpop.f32.mrb[0].mxu0
    %149 = vdwg.mxu0
    %v150 = vmax.f32 %v145, 0.0
    %v151 = vld [vmem:[#allocation7] sm:$0xf]
    %v152 = vld [vmem:[#allocation7 + $0x4] sm:$0xf]
    %v153 = vld [vmem:[#allocation7 + $0x8] sm:$0xf]
    %v154 = vld [vmem:[#allocation7 + $0xc] sm:$0xf]
    %v155 = vld [vmem:[#allocation7 + $0x10] sm:$0xf]
    %v156 = vld [vmem:[#allocation7 + $0x14] sm:$0xf]
    %v157 = vld [vmem:[#allocation7 + $0x18] sm:$0xf]
    %v158 = vld [vmem:[#allocation7 + $0x1c] sm:$0xf]
    %v159 = vpack.c.bf16 %v150, %v150
    %v160 = vld [vmem:[%s5] sm:$0x1]
    %v162 = vlaneseq
    %v163 = vshrl.u32 %v162, 7
    %v164 = vsub.s32 0, %v163
    %v165 = vrot.slane %v160, %v164
    %v175 = vunpack.c.l.b16 %v151
    %v176 = vunpack.c.l.b16 %v152
    %v177 = vunpack.c.l.b16 %v153
    %v178 = vunpack.c.l.b16 %v154
    %v179 = vunpack.c.l.b16 %v155
    %v180 = vunpack.c.l.b16 %v156
    %v181 = vunpack.c.l.b16 %v157
    %v182 = vunpack.c.l.b16 %v158
    %v183 = vpack.c.b16 %v176, %v175
    %v184 = vpack.c.b16 %v178, %v177
    %v185 = vpack.c.b16 %v180, %v179
    %v186 = vpack.c.b16 %v182, %v181
    %vm191 = vcmask 523264
    %v193 = vsel %vm191, %v159, 0
    %195 = vmatprep.subr.bf16.mxu0 0
    %196 = vmatpush1.bf16.msra.mxu0 %v183
    %197 = vmatprep.subr.bf16.mxu0 0
    %198 = vmatpush1.bf16.msra.mxu0 %v184
    %199 = vmatprep.subr.bf16.mxu0 0
    %200 = vmatpush1.bf16.msra.mxu0 %v185
    %201 = vmatprep.subr.bf16.mxu0 0
    %202 = vmatpush1.bf16.msra.mxu0 %v186
    %203 = vmatprep.subr.bf16.mxu0 0
    %204 = vmatpush1.bf16.msra.mxu0 0
    %205 = vmatprep.subr.bf16.mxu0 0
    %206 = vmatpush1.bf16.msra.mxu0 0
    %207 = vmatprep.subr.bf16.mxu0 0
    %208 = vmatpush1.bf16.msra.mxu0 0
    %209 = vmatprep.subr.bf16.mxu0 0
    %210 = vmatpush1.bf16.msra.mxu0 0
    %211 = vmatprep.subr.bf16.mxu0 0
    %212 = vmatpush1.bf16.msra.mxu0 0
    %213 = vmatprep.subr.bf16.mxu0 0
    %214 = vmatpush1.bf16.msra.mxu0 0
    %215 = vmatprep.subr.bf16.mxu0 0
    %216 = vmatpush1.bf16.msra.mxu0 0
    %217 = vmatprep.subr.bf16.mxu0 0
    %218 = vmatpush1.bf16.msra.mxu0 0
    %219 = vmatprep.subr.bf16.mxu0 0
    %220 = vmatpush1.bf16.msra.mxu0 0
    %221 = vmatprep.subr.bf16.mxu0 0
    %222 = vmatpush1.bf16.msra.mxu0 0
    %223 = vmatprep.subr.bf16.mxu0 0
    %224 = vmatpush1.bf16.msra.mxu0 0
    %225 = vmatprep.subr.bf16.mxu0 0
    %226 = vmatpush1.bf16.msra.mxu0 0
    %227 = vmatprep.mubr.bf16.mxu0 0
    %228 = vmatmul.mubr.bf16.gmra.mrb[0].mxu0 %v193
    %v229 = vpop.f32.mrb[0].mxu0
    %v230 = vadd.f32 %v165, %v229
    %v231 = vpop.f32.mrb[0].mxu0
    %v232 = vpop.f32.mrb[0].mxu0
    %v233 = vpop.f32.mrb[0].mxu0
    %234 = vdwg.mxu0
    %v235 = vmax.f32 %v230, 0.0
    %v236 = vld [vmem:[#allocation8] sm:$0xf]
    %v237 = vld [vmem:[#allocation8 + $0x4] sm:$0xf]
    %v238 = vld [vmem:[#allocation8 + $0x8] sm:$0xf]
    %v239 = vld [vmem:[#allocation8 + $0xc] sm:$0xf]
    %v240 = vld [vmem:[#allocation8 + $0x10] sm:$0xf]
    %v241 = vld [vmem:[#allocation8 + $0x14] sm:$0xf]
    %v242 = vld [vmem:[#allocation8 + $0x18] sm:$0xf]
    %v243 = vld [vmem:[#allocation8 + $0x1c] sm:$0xf]
    %v244 = vpack.c.bf16 %v235, %v235
    %v245 = vld [vmem:[%s6] sm:$0x1]
    %v247 = vlaneseq
    %v248 = vshrl.u32 %v247, 7
    %v249 = vsub.s32 0, %v248
    %v250 = vrot.slane %v245, %v249
    %v260 = vunpack.c.l.b16 %v236
    %v261 = vunpack.c.l.b16 %v237
    %v262 = vunpack.c.l.b16 %v238
    %v263 = vunpack.c.l.b16 %v239
    %v264 = vunpack.c.l.b16 %v240
    %v265 = vunpack.c.l.b16 %v241
    %v266 = vunpack.c.l.b16 %v242
    %v267 = vunpack.c.l.b16 %v243
    %v268 = vpack.c.b16 %v261, %v260
    %v269 = vpack.c.b16 %v263, %v262
    %v270 = vpack.c.b16 %v265, %v264
    %v271 = vpack.c.b16 %v267, %v266
    %v277 = vsel %vm191, %v244, 0
    %279 = vmatprep.subr.bf16.mxu0 0
    %280 = vmatpush1.bf16.msra.mxu0 %v268
    %281 = vmatprep.subr.bf16.mxu0 0
    %282 = vmatpush1.bf16.msra.mxu0 %v269
    %283 = vmatprep.subr.bf16.mxu0 0
    %284 = vmatpush1.bf16.msra.mxu0 %v270
    %285 = vmatprep.subr.bf16.mxu0 0
    %286 = vmatpush1.bf16.msra.mxu0 %v271
    %287 = vmatprep.subr.bf16.mxu0 0
    %288 = vmatpush1.bf16.msra.mxu0 0
    %289 = vmatprep.subr.bf16.mxu0 0
    %290 = vmatpush1.bf16.msra.mxu0 0
    %291 = vmatprep.subr.bf16.mxu0 0
    %292 = vmatpush1.bf16.msra.mxu0 0
    %293 = vmatprep.subr.bf16.mxu0 0
    %294 = vmatpush1.bf16.msra.mxu0 0
    %295 = vmatprep.subr.bf16.mxu0 0
    %296 = vmatpush1.bf16.msra.mxu0 0
    %297 = vmatprep.subr.bf16.mxu0 0
    %298 = vmatpush1.bf16.msra.mxu0 0
    %299 = vmatprep.subr.bf16.mxu0 0
    %300 = vmatpush1.bf16.msra.mxu0 0
    %301 = vmatprep.subr.bf16.mxu0 0
    %302 = vmatpush1.bf16.msra.mxu0 0
    %303 = vmatprep.subr.bf16.mxu0 0
    %304 = vmatpush1.bf16.msra.mxu0 0
    %305 = vmatprep.subr.bf16.mxu0 0
    %306 = vmatpush1.bf16.msra.mxu0 0
    %307 = vmatprep.subr.bf16.mxu0 0
    %308 = vmatpush1.bf16.msra.mxu0 0
    %309 = vmatprep.subr.bf16.mxu0 0
    %310 = vmatpush1.bf16.msra.mxu0 0
    %311 = vmatprep.mubr.bf16.mxu0 0
    %312 = vmatmul.mubr.bf16.gmra.mrb[0].mxu0 %v277
    %v313 = vpop.f32.mrb[0].mxu0
    %v314 = vadd.f32 %v250, %v313
    %v315 = vpop.f32.mrb[0].mxu0
    %v316 = vpop.f32.mrb[0].mxu0
    %v317 = vpop.f32.mrb[0].mxu0
    %318 = vdwg.mxu0
    %319 = vst.msk [vmem:[#allocation10] sm:$0xff] %vm106, %v314
    // Predicated region
    $region46: #{tpu_custom_call.1} parent=1 // pred_check
      _
    $region47: #{tpu_custom_call.1} parent=1 // pred_check_branch
      %321 = sbr.rel (0) target = $region49
    $region48: #{tpu_custom_call.1} parent=1 // pred_region
      %s323 = ssub.s32 128, 128
      %324 = vsyncadd [#allocation4], %s323
      %s326 = sshll.u32 [#allocation10], 4
      %s327 = int_to_ptr.vmem [resolvable:$true] %s326
      %329 = dma.vmem_to_hbm [thread:$0]  %s327, 128, %s7, [#allocation4]
    $region49: #{tpu_custom_call.1} parent=1 // pred_fallthru
      _
    // Predicated region
    $region50: #{tpu_custom_call.1} parent=1 // pred_check
      _
    $region51: #{tpu_custom_call.1} parent=1 // pred_check_branch
      %331 = sbr.rel (0) target = $region53
    $region52: #{tpu_custom_call.1} parent=1 // pred_region
      %332 = dma.done [#allocation4], 128
    $region53: #{tpu_custom_call.1} parent=1 // pred_fallthru
      _
    %333 = vsyncpa [#allocation3], 1
    %334 = vsyncpa [#allocation6], 1
    %335 = vsyncpa [#allocation9], 1
    %336 = vsyncpa [#allocation4], 1

</llo_original>
